<compile_context>
chip_gen: v5e
topology: v5e:2x2
jax: 0.10.0
libtpu: 0.0.40
codegen_flags: <defaults>
</compile_context>

<pallas_src>
import functools

import jax
import jax.numpy as jnp
from jax.experimental import pallas as pl
from jax.experimental.pallas import tpu as pltpu

_LANE = 128
_ROW_ALIGN = 16  # bf16 packs 2 rows per sublane -> keep batch tiles 16-aligned


def _round_up(n, m):
    return ((n + m - 1) // m) * m


def fcnn_kernel(x_ref, w1_ref, b1_ref, w2_ref, b2_ref, w3_ref, b3_ref, o_ref):
    # h1 = tanh(x @ W1 + b1); h2 = tanh(h1 @ W2 + b2); y = h2 @ W3 + b3
    # MXU matmuls in bf16 with f32 accumulation; bias add + tanh in f32.
    x = x_ref[...]
    h1 = jnp.tanh(
        jnp.dot(x, w1_ref[...], preferred_element_type=jnp.float32) + b1_ref[...]
    )
    h2 = jnp.tanh(
        jnp.dot(h1.astype(w2_ref.dtype), w2_ref[...],
                preferred_element_type=jnp.float32) + b2_ref[...]
    )
    y = jnp.dot(h2.astype(w3_ref.dtype), w3_ref[...],
                preferred_element_type=jnp.float32) + b3_ref[...]
    o_ref[...] = y.astype(o_ref.dtype)


@functools.partial(jax.jit, static_argnames=("batch_tile",))
def fcnn_forward(x, w1, b1, w2, b2, w3, b3, *, batch_tile=512):
    B, in_dim = x.shape
    hidden_dim = w1.shape[1]
    out_dim = w3.shape[1]
    orig_dtype = x.dtype

    # ---- lane-dense feature padding (exact: zero pad contributes nothing) ----
    in_p = _round_up(in_dim, _LANE)
    h_p = _round_up(hidden_dim, _LANE)
    out_p = _round_up(out_dim, _LANE)

    # ---- batch tile: big, 16-row aligned, >= 2 grid steps when batch allows ----
    if B > batch_tile:
        tile = batch_tile
    elif B > 2 * _ROW_ALIGN:
        # aim for at least two grid steps so the megacore "parallel" axis helps
        tile = _round_up(max(B // 2, _ROW_ALIGN), _ROW_ALIGN)
    else:
        tile = _round_up(max(B, _ROW_ALIGN), _ROW_ALIGN)
    tile = min(tile, batch_tile)
    B_p = _round_up(B, tile)
    grid = (B_p // tile,)

    # ---- pack operands: x / weights in bf16, biases in f32, all padded ----
    bf16 = jnp.bfloat16
    xp = jnp.zeros((B_p, in_p), bf16).at[:B, :in_dim].set(x.astype(bf16))
    w1p = jnp.zeros((in_p, h_p), bf16).at[:in_dim, :hidden_dim].set(w1.astype(bf16))
    w2p = jnp.zeros((h_p, h_p), bf16).at[:hidden_dim, :hidden_dim].set(w2.astype(bf16))
    w3p = jnp.zeros((h_p, out_p), bf16).at[:hidden_dim, :out_dim].set(w3.astype(bf16))
    b1p = jnp.zeros((1, h_p), jnp.float32).at[:, :hidden_dim].set(
        b1.reshape(1, -1).astype(jnp.float32))
    b2p = jnp.zeros((1, h_p), jnp.float32).at[:, :hidden_dim].set(
        b2.reshape(1, -1).astype(jnp.float32))
    b3p = jnp.zeros((1, out_p), jnp.float32).at[:, :out_dim].set(
        b3.reshape(1, -1).astype(jnp.float32))

    # x / out tiled along the batch axis; weights & biases are resident
    # (constant index_map) across all grid steps.
    in_specs = [
        pl.BlockSpec((tile, in_p), lambda i: (i, 0)),   # x tile
        pl.BlockSpec((in_p, h_p), lambda i: (0, 0)),    # W1
        pl.BlockSpec((1, h_p), lambda i: (0, 0)),       # b1
        pl.BlockSpec((h_p, h_p), lambda i: (0, 0)),     # W2
        pl.BlockSpec((1, h_p), lambda i: (0, 0)),       # b2
        pl.BlockSpec((h_p, out_p), lambda i: (0, 0)),   # W3
        pl.BlockSpec((1, out_p), lambda i: (0, 0)),     # b3
    ]
    out_spec = pl.BlockSpec((tile, out_p), lambda i: (i, 0))

    # ---- advisory cost estimate for XLA's scheduler ----
    flops = 2 * B_p * (in_p * h_p + h_p * h_p + h_p * out_p)
    transcendentals = 2 * B_p * h_p
    bytes_accessed = (
        xp.size * 2
        + (w1p.size + w2p.size + w3p.size) * 2
        + (b1p.size + b2p.size + b3p.size) * 4
        + B_p * out_p * 4
    )
    cost = pl.CostEstimate(flops=flops, transcendentals=transcendentals,
                           bytes_accessed=bytes_accessed)

    # ---- explicit VMEM budget (double-buffered x/out tiles + resident weights),
    #      clamped to 64 MiB so the same tiling stays safe on v7x ----
    vmem_needed = (
        2 * tile * in_p * 2            # x tile, bf16, double-buffered
        + 2 * tile * out_p * 4         # out tile, f32, double-buffered
        + 2 * 2 * (in_p * h_p + h_p * h_p + h_p * out_p)  # weights, bf16, 2 bufs
        + 2 * 4 * (2 * h_p + out_p)    # biases, f32, 2 bufs
    )
    vmem_limit = max(32 * 1024 * 1024,
                     min(int(vmem_needed * 1.5) + (2 << 20), 64 * 1024 * 1024))
    # TODO(synk): for very large hidden_dim (W2 no longer VMEM-resident on v7x),
    # add a hidden/K grid axis with an f32 accumulator scratch instead.

    y_pad = pl.pallas_call(
        fcnn_kernel,
        out_shape=jax.ShapeDtypeStruct((B_p, out_p), jnp.float32),
        grid_spec=pltpu.PrefetchScalarGridSpec(
            num_scalar_prefetch=0,
            grid=grid,
            in_specs=in_specs,
            out_specs=out_spec,
        ),
        compiler_params=pltpu.CompilerParams(
            dimension_semantics=("parallel",),
            vmem_limit_bytes=vmem_limit,
        ),
        cost_estimate=cost,
    )(xp, w1p, b1p, w2p, b2p, w3p, b3p)

    return y_pad[:B, :out_dim].astype(orig_dtype)


def init_linear_params(key, fan_in, fan_out, dtype=jnp.float32):
    """Deterministic init mimicking torch.nn.Linear defaults:
    weight, bias ~ U(-1/sqrt(fan_in), 1/sqrt(fan_in)).
    Returns W already transposed to [fan_in, fan_out] and b as [1, fan_out]."""
    kw, kb = jax.random.split(key)
    bound = 1.0 / jnp.sqrt(jnp.asarray(fan_in, dtype))
    w = jax.random.uniform(kw, (fan_in, fan_out), dtype, -bound, bound)
    b = jax.random.uniform(kb, (1, fan_out), dtype, -bound, bound)
    return w, b


def fcnn_reference(x, w1, b1, w2, b2, w3, b3):
    h1 = jnp.tanh(x @ w1 + b1)
    h2 = jnp.tanh(h1 @ w2 + b2)
    return h2 @ w3 + b3


if __name__ == "__main__":
    # Small shapes consistent with FCNN(in_dim, out_dim, hidden_dim)
    batch, in_dim, out_dim, hidden_dim = 16, 4, 4, 32

    key = jax.random.PRNGKey(0)
    kx, k1, k2, k3 = jax.random.split(key, 4)

    x = jax.random.normal(kx, (batch, in_dim), jnp.float32)
    w1, b1 = init_linear_params(k1, in_dim, hidden_dim)
    w2, b2 = init_linear_params(k2, hidden_dim, hidden_dim)
    w3, b3 = init_linear_params(k3, hidden_dim, out_dim)

    y = fcnn_forward(x, w1, b1, w2, b2, w3, b3)
    y = jax.block_until_ready(y)

    y_ref = fcnn_reference(x, w1, b1, w2, b2, w3, b3)
    assert y.shape == (batch, out_dim)
    # bf16 matmul inputs with f32 accumulation -> relaxed tolerance vs f32 ref.
    assert jnp.allclose(y, y_ref, atol=5e-2, rtol=5e-2), "mismatch vs reference"

    print("KERNEL_OK")
</pallas_src>

<mosaic_0001>
module attributes {stable_mosaic.version = 11 : i64} {
  func.func @fcnn_kernel(%arg0: i32, %arg1: memref<16x128xbf16, #tpu.memory_space<vmem>>, %arg2: memref<128x128xbf16, #tpu.memory_space<vmem>>, %arg3: memref<1x128xf32, #tpu.memory_space<vmem>>, %arg4: memref<128x128xbf16, #tpu.memory_space<vmem>>, %arg5: memref<1x128xf32, #tpu.memory_space<vmem>>, %arg6: memref<128x128xbf16, #tpu.memory_space<vmem>>, %arg7: memref<1x128xf32, #tpu.memory_space<vmem>>, %arg8: memref<16x128xf32, #tpu.memory_space<vmem>>) attributes {dimension_semantics = [#tpu.dimension_semantics<parallel>], iteration_bounds = array<i64: 1>, scalar_prefetch = 0 : i64, scratch_operands = 0 : i64, tpu.core_type = #tpu.core_type<tc>, window_params = [{transform_indices = @transform_0, window_bounds = array<i64: 16, 128>}, {pipeline_mode = #tpu.pipeline_mode<synchronous>, transform_indices = @transform_1, window_bounds = array<i64: 128, 128>}, {pipeline_mode = #tpu.pipeline_mode<synchronous>, transform_indices = @transform_2, window_bounds = array<i64: 1, 128>}, {pipeline_mode = #tpu.pipeline_mode<synchronous>, transform_indices = @transform_3, window_bounds = array<i64: 128, 128>}, {pipeline_mode = #tpu.pipeline_mode<synchronous>, transform_indices = @transform_4, window_bounds = array<i64: 1, 128>}, {pipeline_mode = #tpu.pipeline_mode<synchronous>, transform_indices = @transform_5, window_bounds = array<i64: 128, 128>}, {pipeline_mode = #tpu.pipeline_mode<synchronous>, transform_indices = @transform_6, window_bounds = array<i64: 1, 128>}, {transform_indices = @transform_7, window_bounds = array<i64: 16, 128>}]} {
    %c0 = arith.constant 0 : index
    %c0_0 = arith.constant 0 : index
    %0 = vector.load %arg1[%c0, %c0_0] : memref<16x128xbf16, #tpu.memory_space<vmem>>, vector<16x128xbf16>
    %c0_1 = arith.constant 0 : index
    %c0_2 = arith.constant 0 : index
    %1 = vector.load %arg2[%c0_1, %c0_2] : memref<128x128xbf16, #tpu.memory_space<vmem>>, vector<128x128xbf16>
    %cst = arith.constant dense<0.000000e+00> : vector<16x128xf32>
    %2 = tpu.matmul %0, %1, %cst {dimension_numbers = #tpu.dot_dimension_numbers<[1], [0], [0], [1], [0, 0, 1, 1], [], []>} : vector<16x128xbf16>, vector<128x128xbf16>, vector<16x128xf32> -> vector<16x128xf32>
    %c0_3 = arith.constant 0 : index
    %c0_4 = arith.constant 0 : index
    %3 = vector.load %arg3[%c0_3, %c0_4] : memref<1x128xf32, #tpu.memory_space<vmem>>, vector<1x128xf32>
    %4 = vector.broadcast %3 : vector<1x128xf32> to vector<16x128xf32>
    %5 = arith.addf %2, %4 : vector<16x128xf32>
    %6 = math.tanh %5 : vector<16x128xf32>
    %7 = arith.truncf %6 : vector<16x128xf32> to vector<16x128xbf16>
    %c0_5 = arith.constant 0 : index
    %c0_6 = arith.constant 0 : index
    %8 = vector.load %arg4[%c0_5, %c0_6] : memref<128x128xbf16, #tpu.memory_space<vmem>>, vector<128x128xbf16>
    %cst_7 = arith.constant dense<0.000000e+00> : vector<16x128xf32>
    %9 = tpu.matmul %7, %8, %cst_7 {dimension_numbers = #tpu.dot_dimension_numbers<[1], [0], [0], [1], [0, 0, 1, 1], [], []>} : vector<16x128xbf16>, vector<128x128xbf16>, vector<16x128xf32> -> vector<16x128xf32>
    %c0_8 = arith.constant 0 : index
    %c0_9 = arith.constant 0 : index
    %10 = vector.load %arg5[%c0_8, %c0_9] : memref<1x128xf32, #tpu.memory_space<vmem>>, vector<1x128xf32>
    %11 = vector.broadcast %10 : vector<1x128xf32> to vector<16x128xf32>
    %12 = arith.addf %9, %11 : vector<16x128xf32>
    %13 = math.tanh %12 : vector<16x128xf32>
    %14 = arith.truncf %13 : vector<16x128xf32> to vector<16x128xbf16>
    %c0_10 = arith.constant 0 : index
    %c0_11 = arith.constant 0 : index
    %15 = vector.load %arg6[%c0_10, %c0_11] : memref<128x128xbf16, #tpu.memory_space<vmem>>, vector<128x128xbf16>
    %cst_12 = arith.constant dense<0.000000e+00> : vector<16x128xf32>
    %16 = tpu.matmul %14, %15, %cst_12 {dimension_numbers = #tpu.dot_dimension_numbers<[1], [0], [0], [1], [0, 0, 1, 1], [], []>} : vector<16x128xbf16>, vector<128x128xbf16>, vector<16x128xf32> -> vector<16x128xf32>
    %c0_13 = arith.constant 0 : index
    %c0_14 = arith.constant 0 : index
    %17 = vector.load %arg7[%c0_13, %c0_14] : memref<1x128xf32, #tpu.memory_space<vmem>>, vector<1x128xf32>
    %18 = vector.broadcast %17 : vector<1x128xf32> to vector<16x128xf32>
    %19 = arith.addf %16, %18 : vector<16x128xf32>
    %c0_15 = arith.constant 0 : index
    %c0_16 = arith.constant 0 : index
    %20 = vector.load %arg8[%c0_15, %c0_16] : memref<16x128xf32, #tpu.memory_space<vmem>>, vector<16x128xf32>
    tpu.vector_store %arg8[%c0_15, %c0_16], %19 {strides = array<i32>} : memref<16x128xf32, #tpu.memory_space<vmem>>, vector<16x128xf32>,
    return
  }
  func.func @transform_0(%arg0: i32) -> (i32, i32) {
    %c0_i32 = arith.constant 0 : i32
    %c0_i32_0 = arith.constant 0 : i32
    return %arg0, %c0_i32 : i32, i32
  }
  func.func @transform_1(%arg0: i32) -> (i32, i32) {
    %c0_i32 = arith.constant 0 : i32
    %c0_i32_0 = arith.constant 0 : i32
    %c0_i32_1 = arith.constant 0 : i32
    return %c0_i32, %c0_i32_0 : i32, i32
  }
  func.func @transform_2(%arg0: i32) -> (i32, i32) {
    %c0_i32 = arith.constant 0 : i32
    %c0_i32_0 = arith.constant 0 : i32
    %c0_i32_1 = arith.constant 0 : i32
    return %c0_i32, %c0_i32_0 : i32, i32
  }
  func.func @transform_3(%arg0: i32) -> (i32, i32) {
    %c0_i32 = arith.constant 0 : i32
    %c0_i32_0 = arith.constant 0 : i32
    %c0_i32_1 = arith.constant 0 : i32
    return %c0_i32, %c0_i32_0 : i32, i32
  }
  func.func @transform_4(%arg0: i32) -> (i32, i32) {
    %c0_i32 = arith.constant 0 : i32
    %c0_i32_0 = arith.constant 0 : i32
    %c0_i32_1 = arith.constant 0 : i32
    return %c0_i32, %c0_i32_0 : i32, i32
  }
  func.func @transform_5(%arg0: i32) -> (i32, i32) {
    %c0_i32 = arith.constant 0 : i32
    %c0_i32_0 = arith.constant 0 : i32
    %c0_i32_1 = arith.constant 0 : i32
    return %c0_i32, %c0_i32_0 : i32, i32
  }
  func.func @transform_6(%arg0: i32) -> (i32, i32) {
    %c0_i32 = arith.constant 0 : i32
    %c0_i32_0 = arith.constant 0 : i32
    %c0_i32_1 = arith.constant 0 : i32
    return %c0_i32, %c0_i32_0 : i32, i32
  }
  func.func @transform_7(%arg0: i32) -> (i32, i32) {
    %c0_i32 = arith.constant 0 : i32
    %c0_i32_0 = arith.constant 0 : i32
    return %arg0, %c0_i32 : i32, i32
  }
}

</mosaic_0001>

<llo_original>
// kernel: fcnn_forward.1
$region0: #{fcnn_forward.1}
  #allocation0 [shape = 'u32[]', space=smem, size = 0x4, offset = 0x4, fixed_abs, tag = 'smem constant byte address 0x4 - core index']
  #allocation1 [shape = 'u32[72,128]{1,0:T(1,128)}', space=vmem, size = 0x9000, scoped, tag = 'internal scratch']
  %s0 = inlined_call_operand.vmem [shape: bf16[16,128], index: 0, kind: input, shape index: {}]
  %s1 = inlined_call_operand.vmem [shape: bf16[128,128], index: 1, kind: input, shape index: {}]
  %s2 = inlined_call_operand.vmem [shape: f32[1,128], index: 2, kind: input, shape index: {}]
  %s3 = inlined_call_operand.vmem [shape: bf16[128,128], index: 3, kind: input, shape index: {}]
  %s4 = inlined_call_operand.vmem [shape: f32[1,128], index: 4, kind: input, shape index: {}]
  %s5 = inlined_call_operand.vmem [shape: bf16[128,128], index: 5, kind: input, shape index: {}]
  %s6 = inlined_call_operand.vmem [shape: f32[1,128], index: 6, kind: input, shape index: {}]
  %s7 = inlined_call_operand.vmem [shape: f32[16,128], index: 7, kind: output, shape index: {}]
  %s8 = sld [smem:[#allocation0]]
  $region38: #{fcnn_forward.1} parent=0
    _
  %s10 = ssub.s32 1, %s8
  %s11 = scalar_select 0, %s10, %s8
  // Predicated region
  $region2: #{fcnn_forward.1} parent=0 // pred_check
    _
  $region3: #{fcnn_forward.1} parent=0 // pred_check_branch
    %13 = sbr.rel (0) target = $region5
  $region4: #{fcnn_forward.1} parent=0 // pred_region
    _
  $region5: #{fcnn_forward.1} parent=0 // pred_fallthru
    _
  // Predicated region
  $region6: #{fcnn_forward.1} parent=0 // pred_check
    _
  $region7: #{fcnn_forward.1} parent=0 // pred_check_branch
    %15 = sbr.rel (0) target = $region9
  $region8: #{fcnn_forward.1} parent=0 // pred_region
    _
  $region9: #{fcnn_forward.1} parent=0 // pred_fallthru
    _
  // Predicated region
  $region10: #{fcnn_forward.1} parent=0 // pred_check
    _
  $region11: #{fcnn_forward.1} parent=0 // pred_check_branch
    %17 = sbr.rel (0) target = $region13
  $region12: #{fcnn_forward.1} parent=0 // pred_region
    _
  $region13: #{fcnn_forward.1} parent=0 // pred_fallthru
    _
  // Predicated region
  $region14: #{fcnn_forward.1} parent=0 // pred_check
    _
  $region15: #{fcnn_forward.1} parent=0 // pred_check_branch
    %19 = sbr.rel (0) target = $region17
  $region16: #{fcnn_forward.1} parent=0 // pred_region
    _
  $region17: #{fcnn_forward.1} parent=0 // pred_fallthru
    _
  // Predicated region
  $region18: #{fcnn_forward.1} parent=0 // pred_check
    _
  $region19: #{fcnn_forward.1} parent=0 // pred_check_branch
    %21 = sbr.rel (0) target = $region21
  $region20: #{fcnn_forward.1} parent=0 // pred_region
    _
  $region21: #{fcnn_forward.1} parent=0 // pred_fallthru
    _
  // Predicated region
  $region22: #{fcnn_forward.1} parent=0 // pred_check
    _
  $region23: #{fcnn_forward.1} parent=0 // pred_check_branch
    %23 = sbr.rel (0) target = $region25
  $region24: #{fcnn_forward.1} parent=0 // pred_region
    _
  $region25: #{fcnn_forward.1} parent=0 // pred_fallthru
    _
  // Predicated region
  $region26: #{fcnn_forward.1} parent=0 // pred_check
    _
  $region27: #{fcnn_forward.1} parent=0 // pred_check_branch
    %25 = sbr.rel (0) target = $region29
  $region28: #{fcnn_forward.1} parent=0 // pred_region
    _
  $region29: #{fcnn_forward.1} parent=0 // pred_fallthru
    _
  %v26 = vld [vmem:[%s0] sm:$0xf]
  %v27 = vld [vmem:[%s0 + $0x4] sm:$0xf]
  %v28 = vld [vmem:[%s1] sm:$0xf]
  %v29 = vld [vmem:[%s1 + $0x4] sm:$0xf]
  %v30 = vld [vmem:[%s1 + $0x8] sm:$0xf]
  %v31 = vld [vmem:[%s1 + $0xc] sm:$0xf]
  %v32 = vld [vmem:[%s1 + $0x10] sm:$0xf]
  %v33 = vld [vmem:[%s1 + $0x14] sm:$0xf]
  %v34 = vld [vmem:[%s1 + $0x18] sm:$0xf]
  %v35 = vld [vmem:[%s1 + $0x1c] sm:$0xf]
  %v36 = vld [vmem:[%s1 + $0x20] sm:$0xf]
  %v37 = vld [vmem:[%s1 + $0x24] sm:$0xf]
  %v38 = vld [vmem:[%s1 + $0x28] sm:$0xf]
  %v39 = vld [vmem:[%s1 + $0x2c] sm:$0xf]
  %v40 = vld [vmem:[%s1 + $0x30] sm:$0xf]
  %v41 = vld [vmem:[%s1 + $0x34] sm:$0xf]
  %v42 = vld [vmem:[%s1 + $0x38] sm:$0xf]
  %v43 = vld [vmem:[%s1 + $0x3c] sm:$0xf]
  %v44 = vld [vmem:[%s2] sm:$0x1]
  %v46 = vperm.slane %v44, 0
  %v50 = vunpack.c.l.b16 %v26
  %v51 = vunpack.c.l.b16 %v27
  %v52 = vpack.c.b16 %v51, %v50
  %v70 = vunpack.c.l.b16 %v28
  %v71 = vunpack.c.l.b16 %v29
  %v72 = vunpack.c.l.b16 %v30
  %v73 = vunpack.c.l.b16 %v31
  %v74 = vunpack.c.l.b16 %v32
  %v75 = vunpack.c.l.b16 %v33
  %v76 = vunpack.c.l.b16 %v34
  %v77 = vunpack.c.l.b16 %v35
  %v78 = vunpack.c.l.b16 %v36
  %v79 = vunpack.c.l.b16 %v37
  %v80 = vunpack.c.l.b16 %v38
  %v81 = vunpack.c.l.b16 %v39
  %v82 = vunpack.c.l.b16 %v40
  %v83 = vunpack.c.l.b16 %v41
  %v84 = vunpack.c.l.b16 %v42
  %v85 = vunpack.c.l.b16 %v43
  %v86 = vpack.c.b16 %v71, %v70
  %v87 = vpack.c.b16 %v73, %v72
  %v88 = vpack.c.b16 %v75, %v74
  %v89 = vpack.c.b16 %v77, %v76
  %v90 = vpack.c.b16 %v79, %v78
  %v91 = vpack.c.b16 %v81, %v80
  %v92 = vpack.c.b16 %v83, %v82
  %v93 = vpack.c.b16 %v85, %v84
  %102 = vmatpush.bf16.msra.mxu0 %v93
  %103 = vmatpush.bf16.msra.mxu0 %v92
  %104 = vmatpush.bf16.msra.mxu0 %v91
  %105 = vmatpush.bf16.msra.mxu0 %v90
  %106 = vmatpush.bf16.msra.mxu0 %v89
  %107 = vmatpush.bf16.msra.mxu0 %v88
  %108 = vmatpush.bf16.msra.mxu0 %v87
  %109 = vmatpush.bf16.msra.mxu0 %v86
  %110 = vmatmul.bf16.gmra.mxu0 %v52
  %v111 = vpop.f32.mrf.mxu0
  %v112 = vadd.f32 %v46, %v111
  %v113 = vpop.f32.mrf.mxu0
  %v114 = vadd.f32 %v46, %v113
  %115 = vdwg.mxu0
  %v116 = vtanh.pop %v112
  %v117 = vtanh.pop %v114
  %v118 = vpack.c.bf16 %v117, %v116
  %v119 = vld [vmem:[%s3] sm:$0xf]
  %v120 = vld [vmem:[%s3 + $0x4] sm:$0xf]
  %v121 = vld [vmem:[%s3 + $0x8] sm:$0xf]
  %v122 = vld [vmem:[%s3 + $0xc] sm:$0xf]
  %v123 = vld [vmem:[%s3 + $0x10] sm:$0xf]
  %v124 = vld [vmem:[%s3 + $0x14] sm:$0xf]
  %v125 = vld [vmem:[%s3 + $0x18] sm:$0xf]
  %v126 = vld [vmem:[%s3 + $0x1c] sm:$0xf]
  %v127 = vld [vmem:[%s3 + $0x20] sm:$0xf]
  %v128 = vld [vmem:[%s3 + $0x24] sm:$0xf]
  %v129 = vld [vmem:[%s3 + $0x28] sm:$0xf]
  %v130 = vld [vmem:[%s3 + $0x2c] sm:$0xf]
  %v131 = vld [vmem:[%s3 + $0x30] sm:$0xf]
  %v132 = vld [vmem:[%s3 + $0x34] sm:$0xf]
  %v133 = vld [vmem:[%s3 + $0x38] sm:$0xf]
  %v134 = vld [vmem:[%s3 + $0x3c] sm:$0xf]
  %v135 = vld [vmem:[%s4] sm:$0x1]
  %v137 = vperm.slane %v135, 0
  %v155 = vunpack.c.l.b16 %v119
  %v156 = vunpack.c.l.b16 %v120
  %v157 = vunpack.c.l.b16 %v121
  %v158 = vunpack.c.l.b16 %v122
  %v159 = vunpack.c.l.b16 %v123
  %v160 = vunpack.c.l.b16 %v124
  %v161 = vunpack.c.l.b16 %v125
  %v162 = vunpack.c.l.b16 %v126
  %v163 = vunpack.c.l.b16 %v127
  %v164 = vunpack.c.l.b16 %v128
  %v165 = vunpack.c.l.b16 %v129
  %v166 = vunpack.c.l.b16 %v130
  %v167 = vunpack.c.l.b16 %v131
  %v168 = vunpack.c.l.b16 %v132
  %v169 = vunpack.c.l.b16 %v133
  %v170 = vunpack.c.l.b16 %v134
  %v171 = vpack.c.b16 %v156, %v155
  %v172 = vpack.c.b16 %v158, %v157
  %v173 = vpack.c.b16 %v160, %v159
  %v174 = vpack.c.b16 %v162, %v161
  %v175 = vpack.c.b16 %v164, %v163
  %v176 = vpack.c.b16 %v166, %v165
  %v177 = vpack.c.b16 %v168, %v167
  %v178 = vpack.c.b16 %v170, %v169
  %187 = vmatpush.bf16.msra.mxu0 %v178
  %188 = vmatpush.bf16.msra.mxu0 %v177
  %189 = vmatpush.bf16.msra.mxu0 %v176
  %190 = vmatpush.bf16.msra.mxu0 %v175
  %191 = vmatpush.bf16.msra.mxu0 %v174
  %192 = vmatpush.bf16.msra.mxu0 %v173
  %193 = vmatpush.bf16.msra.mxu0 %v172
  %194 = vmatpush.bf16.msra.mxu0 %v171
  %195 = vmatmul.bf16.gmra.mxu0 %v118
  %v196 = vpop.f32.mrf.mxu0
  %v197 = vadd.f32 %v137, %v196
  %v198 = vpop.f32.mrf.mxu0
  %v199 = vadd.f32 %v137, %v198
  %200 = vdwg.mxu0
  %v201 = vtanh.pop %v197
  %v202 = vtanh.pop %v199
  %v203 = vpack.c.bf16 %v202, %v201
  %v204 = vld [vmem:[%s5] sm:$0xf]
  %v205 = vld [vmem:[%s5 + $0x4] sm:$0xf]
  %v206 = vld [vmem:[%s5 + $0x8] sm:$0xf]
  %v207 = vld [vmem:[%s5 + $0xc] sm:$0xf]
  %v208 = vld [vmem:[%s5 + $0x10] sm:$0xf]
  %v209 = vld [vmem:[%s5 + $0x14] sm:$0xf]
  %v210 = vld [vmem:[%s5 + $0x18] sm:$0xf]
  %v211 = vld [vmem:[%s5 + $0x1c] sm:$0xf]
  %v212 = vld [vmem:[%s5 + $0x20] sm:$0xf]
  %v213 = vld [vmem:[%s5 + $0x24] sm:$0xf]
  %v214 = vld [vmem:[%s5 + $0x28] sm:$0xf]
  %v215 = vld [vmem:[%s5 + $0x2c] sm:$0xf]
  %v216 = vld [vmem:[%s5 + $0x30] sm:$0xf]
  %v217 = vld [vmem:[%s5 + $0x34] sm:$0xf]
  %v218 = vld [vmem:[%s5 + $0x38] sm:$0xf]
  %v219 = vld [vmem:[%s5 + $0x3c] sm:$0xf]
  %v220 = vld [vmem:[%s6] sm:$0x1]
  %v222 = vperm.slane %v220, 0
  %v240 = vunpack.c.l.b16 %v204
  %v241 = vunpack.c.l.b16 %v205
  %v242 = vunpack.c.l.b16 %v206
  %v243 = vunpack.c.l.b16 %v207
  %v244 = vunpack.c.l.b16 %v208
  %v245 = vunpack.c.l.b16 %v209
  %v246 = vunpack.c.l.b16 %v210
  %v247 = vunpack.c.l.b16 %v211
  %v248 = vunpack.c.l.b16 %v212
  %v249 = vunpack.c.l.b16 %v213
  %v250 = vunpack.c.l.b16 %v214
  %v251 = vunpack.c.l.b16 %v215
  %v252 = vunpack.c.l.b16 %v216
  %v253 = vunpack.c.l.b16 %v217
  %v254 = vunpack.c.l.b16 %v218
  %v255 = vunpack.c.l.b16 %v219
  %v256 = vpack.c.b16 %v241, %v240
  %v257 = vpack.c.b16 %v243, %v242
  %v258 = vpack.c.b16 %v245, %v244
  %v259 = vpack.c.b16 %v247, %v246
  %v260 = vpack.c.b16 %v249, %v248
  %v261 = vpack.c.b16 %v251, %v250
  %v262 = vpack.c.b16 %v253, %v252
  %v263 = vpack.c.b16 %v255, %v254
  %272 = vmatpush.bf16.msra.mxu0 %v263
  %273 = vmatpush.bf16.msra.mxu0 %v262
  %274 = vmatpush.bf16.msra.mxu0 %v261
  %275 = vmatpush.bf16.msra.mxu0 %v260
  %276 = vmatpush.bf16.msra.mxu0 %v259
  %277 = vmatpush.bf16.msra.mxu0 %v258
  %278 = vmatpush.bf16.msra.mxu0 %v257
  %279 = vmatpush.bf16.msra.mxu0 %v256
  %280 = vmatmul.bf16.gmra.mxu0 %v203
  %v281 = vpop.f32.mrf.mxu0
  %v282 = vadd.f32 %v222, %v281
  %v283 = vpop.f32.mrf.mxu0
  %v284 = vadd.f32 %v222, %v283
  %285 = vdwg.mxu0
  %286 = vst [vmem:[%s7] sm:$0xff] %v282
  %287 = vst [vmem:[%s7 + $0x8] sm:$0xff] %v284
  // Predicated region
  $region30: #{fcnn_forward.1} parent=0 // pred_check
    _
  $region31: #{fcnn_forward.1} parent=0 // pred_check_branch
    %289 = sbr.rel (0) target = $region33
  $region32: #{fcnn_forward.1} parent=0 // pred_region
    _
  $region33: #{fcnn_forward.1} parent=0 // pred_fallthru
    _
  // Predicated region
  $region34: #{fcnn_forward.1} parent=0 // pred_check
    _
  $region35: #{fcnn_forward.1} parent=0 // pred_check_branch
    %291 = sbr.rel (0) target = $region37
  $region36: #{fcnn_forward.1} parent=0 // pred_region
    _
  $region37: #{fcnn_forward.1} parent=0 // pred_fallthru
    _

</llo_original>
